<compile_context>
chip_gen: v7x
topology: tpu7x:2x2x1
jax: 0.10.0
libtpu: 0.0.40
codegen_flags: <defaults>
</compile_context>

<pallas_src>
import jax
import jax.numpy as jnp
from jax.experimental import pallas as pl
from jax.experimental.pallas import tpu as pltpu

# ----- small, module-consistent sizes -----
B = 2              # batch
S = 8              # max_seq_length
H = 32             # hidden_size
ITEM_SIZE = 50     # item_size
ITEM_PAD = 64      # item table rows padded for the one-hot gather
GATE_HIDDEN = 256
NE = 3             # len(self.experts)
GATE_PAD = 8       # lane-padded gate-output width (was 128)
EXP_PAD = 128      # lane-padded all-expert slab width (NE*H = 96 -> 128)
BATCH_TILE = 2     # batch rows per grid step (== B here -> grid of 1)
LN_EPS = 1e-12
NEG_INF = -1e30


def moe_kernel(ids_ref,                                     # (BT*S, 1) int32
               emb_ref, pos_ref, gamma_ref, beta_ref,       # tables / LN params
               w1_ref, b1_ref, w2_ref, b2_ref,              # gate
               wexp_ref, bexp_ref,                          # fused expert slab
               out_ref, gw_ref):                            # outputs
    rows = BATCH_TILE * S

    # ---- one-hot MXU gather of item embeddings (OOB id -> zero row) ----
    ids = ids_ref[...]                                                  # (rows, 1)
    lane = jax.lax.broadcasted_iota(jnp.int32, (rows, ITEM_PAD), 1)
    onehot = (ids == lane).astype(jnp.float32)                          # (rows, 64)
    item_emb = jnp.dot(onehot, emb_ref[...],
                       preferred_element_type=jnp.float32)              # (rows, H)

    # ---- input_emb = Dropout(LayerNorm(item_emb + position_emb)); dropout = identity ----
    x = item_emb.reshape(BATCH_TILE, S, H) + pos_ref[...][None, :, :]   # (BT,S,H)
    mean = jnp.mean(x, axis=-1, keepdims=True)
    var = jnp.mean((x - mean) ** 2, axis=-1, keepdims=True)
    ln = (x - mean) * jax.lax.rsqrt(var + LN_EPS)
    ln = ln * gamma_ref[...][None, :, :] + beta_ref[...][None, :, :]

    # ---- gate: mean over seq -> Linear(H,256) -> ReLU -> Linear(256,NE) -> Softmax ----
    gate_in = jnp.mean(ln, axis=1)                                      # (BT, H)
    h = jnp.dot(gate_in, w1_ref[...],
                preferred_element_type=jnp.float32) + b1_ref[...]       # (BT, 256)
    h = jnp.maximum(h, 0.0)
    # w2/b2 are lane-padded to GATE_PAD=8 cols; padded cols carry a -1e30 bias
    # so softmax assigns them exactly zero probability.
    logits = jnp.dot(h, w2_ref[...],
                     preferred_element_type=jnp.float32) + b2_ref[...]  # (BT, 8)
    logits = logits - jnp.max(logits, axis=-1, keepdims=True)
    p = jnp.exp(logits)
    gw = p / jnp.sum(p, axis=-1, keepdims=True)                         # (BT, 8)
    gw_ref[...] = gw

    # ---- experts: ONE lane-padded dot for all NE experts, then gated mix ----
    # TODO(synk): replace synthetic tanh(x @ W_e + b_e) experts with real
    #             GATRec / GRU4Recs / SASRec forward passes.
    e_all = jnp.tanh(
        jnp.dot(item_emb, wexp_ref[...], preferred_element_type=jnp.float32)
        + bexp_ref[...])                                                # (rows, 128)
    e_all = e_all.reshape(BATCH_TILE, S, EXP_PAD)

    combined = gw[:, 0:1][:, :, None] * e_all[:, :, 0:H]
    for e in range(1, NE):
        combined = combined + gw[:, e:e + 1][:, :, None] * e_all[:, :, e * H:(e + 1) * H]
    out_ref[...] = combined                                             # (BT, S, H)


def build_pallas_call():
    nb = B // BATCH_TILE

    def _const(shape):
        # weights: same block every grid step -> stays VMEM-resident
        return pl.BlockSpec(shape, lambda i, _s=len(shape): (0,) * _s)

    return pl.pallas_call(
        moe_kernel,
        out_shape=(jax.ShapeDtypeStruct((B, S, H), jnp.float32),
                   jax.ShapeDtypeStruct((B, GATE_PAD), jnp.float32)),
        grid_spec=pltpu.PrefetchScalarGridSpec(
            num_scalar_prefetch=0,
            grid=(nb,),
            in_specs=[
                pl.BlockSpec((BATCH_TILE * S, 1), lambda i: (i, 0)),  # item ids
                _const((ITEM_PAD, H)),            # padded item embedding table
                _const((S, H)),                   # position embedding
                _const((1, H)),                   # LayerNorm gamma
                _const((1, H)),                   # LayerNorm beta
                _const((H, GATE_HIDDEN)),         # gate W1
                _const((1, GATE_HIDDEN)),         # gate b1
                _const((GATE_HIDDEN, GATE_PAD)),  # gate W2 (lane-padded to 8)
                _const((1, GATE_PAD)),            # gate b2 (-1e30 pad bias)
                _const((H, EXP_PAD)),             # all expert weights, one slab
                _const((1, EXP_PAD)),             # all expert biases
            ],
            out_specs=(pl.BlockSpec((BATCH_TILE, S, H), lambda i: (i, 0, 0)),
                       pl.BlockSpec((BATCH_TILE, GATE_PAD), lambda i: (i, 0))),
        ),
        compiler_params=pltpu.CompilerParams(
            dimension_semantics=("parallel",)),
    )


def init_params(key):
    ks = jax.random.split(key, 8)
    std = 0.02
    item_emb = std * jax.random.normal(ks[0], (ITEM_SIZE, H), jnp.float32)
    item_emb = item_emb.at[0].set(0.0)  # padding_idx=0
    return dict(
        item_emb=item_emb,
        pos_emb=std * jax.random.normal(ks[1], (S, H), jnp.float32),
        ln_gamma=jnp.ones((1, H), jnp.float32),
        ln_beta=jnp.zeros((1, H), jnp.float32),
        w1=std * jax.random.normal(ks[2], (H, GATE_HIDDEN), jnp.float32),
        b1=jnp.zeros((1, GATE_HIDDEN), jnp.float32),
        w2=std * jax.random.normal(ks[3], (GATE_HIDDEN, NE), jnp.float32),
        b2=jnp.zeros((1, NE), jnp.float32),
        we=std * jax.random.normal(ks[4], (NE, H, H), jnp.float32),
        be=jnp.zeros((NE, 1, H), jnp.float32),
    )


def prepare_kernel_params(params):
    """One-time param re-layout for the fused kernel (ahead of the hot path)."""
    # item table row-padded 50 -> 64 for the one-hot MXU gather
    emb_pad = jnp.zeros((ITEM_PAD, H), jnp.float32).at[:ITEM_SIZE].set(params["item_emb"])
    # gate output projection lane-padded to 8; padded logits get a -1e30 bias
    w2_pad = jnp.zeros((GATE_HIDDEN, GATE_PAD), jnp.float32).at[:, :NE].set(params["w2"])
    b2_pad = jnp.full((1, GATE_PAD), NEG_INF, jnp.float32).at[:, :NE].set(params["b2"])
    # all-expert weight slab, lane-padded 96 -> 128: W_all[:, e*H:(e+1)*H] == We[e]
    w_all = jnp.zeros((H, EXP_PAD), jnp.float32).at[:, :NE * H].set(
        jnp.transpose(params["we"], (1, 0, 2)).reshape(H, NE * H))
    b_all = jnp.zeros((1, EXP_PAD), jnp.float32).at[:, :NE * H].set(
        params["be"].reshape(1, NE * H))
    return dict(
        emb_pad=emb_pad, pos_emb=params["pos_emb"],
        ln_gamma=params["ln_gamma"], ln_beta=params["ln_beta"],
        w1=params["w1"], b1=params["b1"],
        w2_pad=w2_pad, b2_pad=b2_pad,
        w_all=w_all, b_all=b_all,
    )


def moe_forward(item_seq, kp):
    ids = item_seq.reshape(B * S, 1).astype(jnp.int32)   # lane-dense id column
    combined, gw_pad = build_pallas_call()(
        ids,
        kp["emb_pad"], kp["pos_emb"], kp["ln_gamma"], kp["ln_beta"],
        kp["w1"], kp["b1"], kp["w2_pad"], kp["b2_pad"],
        kp["w_all"], kp["b_all"])
    aux_loss = 0.0  # eval mode (self.training == False)
    return combined, aux_loss, gw_pad[:, :NE]


def moe_reference(item_seq, params):
    with jax.default_matmul_precision("highest"):
        item_emb = params["item_emb"][item_seq]
        x = item_emb + params["pos_emb"][None]
        mean = x.mean(-1, keepdims=True)
        var = ((x - mean) ** 2).mean(-1, keepdims=True)
        ln = (x - mean) / jnp.sqrt(var + LN_EPS)
        ln = ln * params["ln_gamma"].reshape(1, 1, H) + params["ln_beta"].reshape(1, 1, H)
        gate_in = ln.mean(1)
        h = jax.nn.relu(gate_in @ params["w1"] + params["b1"])
        gw = jax.nn.softmax(h @ params["w2"] + params["b2"], axis=-1)
        out = jnp.zeros_like(item_emb)
        for i in range(NE):
            eo = jnp.tanh(jnp.einsum("bsh,hk->bsk", item_emb, params["we"][i])
                          + params["be"][i])
            out = out + gw[:, i].reshape(-1, 1, 1) * eo
    return out, gw


if __name__ == "__main__":
    key = jax.random.PRNGKey(0)
    pkey, skey = jax.random.split(key)
    params = init_params(pkey)
    kparams = prepare_kernel_params(params)
    item_seq = jax.random.randint(skey, (B, S), 0, ITEM_SIZE, dtype=jnp.int32)

    combined, aux_loss, gate_w = moe_forward(item_seq, kparams)
    combined = jax.block_until_ready(combined)
    gate_w = jax.block_until_ready(gate_w)

    ref_out, ref_gw = moe_reference(item_seq, params)
    assert combined.shape == (B, S, H) and gate_w.shape == (B, NE)
    assert jnp.allclose(gate_w, ref_gw, atol=1e-4, rtol=1e-3)
    assert jnp.allclose(combined, ref_out, atol=2e-4, rtol=1e-3)
    assert aux_loss == 0.0

    print("KERNEL_OK")
</pallas_src>

<mosaic_0001>
module attributes {stable_mosaic.version = 11 : i64} {
  func.func @moe_kernel(%arg0: i32, %arg1: memref<16x1xi32, #tpu.memory_space<vmem>>, %arg2: memref<64x32xf32, #tpu.memory_space<vmem>>, %arg3: memref<8x32xf32, #tpu.memory_space<vmem>>, %arg4: memref<1x32xf32, #tpu.memory_space<vmem>>, %arg5: memref<1x32xf32, #tpu.memory_space<vmem>>, %arg6: memref<32x256xf32, #tpu.memory_space<vmem>>, %arg7: memref<1x256xf32, #tpu.memory_space<vmem>>, %arg8: memref<256x8xf32, #tpu.memory_space<vmem>>, %arg9: memref<1x8xf32, #tpu.memory_space<vmem>>, %arg10: memref<32x128xf32, #tpu.memory_space<vmem>>, %arg11: memref<1x128xf32, #tpu.memory_space<vmem>>, %arg12: memref<2x8x32xf32, #tpu.memory_space<vmem>>, %arg13: memref<2x8xf32, #tpu.memory_space<vmem>>) attributes {dimension_semantics = [#tpu.dimension_semantics<parallel>], iteration_bounds = array<i64: 1>, scalar_prefetch = 0 : i64, scratch_operands = 0 : i64, tpu.core_type = #tpu.core_type<tc>, window_params = [{transform_indices = @transform_0, window_bounds = array<i64: 16, 1>}, {pipeline_mode = #tpu.pipeline_mode<synchronous>, transform_indices = @transform_1, window_bounds = array<i64: 64, 32>}, {pipeline_mode = #tpu.pipeline_mode<synchronous>, transform_indices = @transform_2, window_bounds = array<i64: 8, 32>}, {pipeline_mode = #tpu.pipeline_mode<synchronous>, transform_indices = @transform_3, window_bounds = array<i64: 1, 32>}, {pipeline_mode = #tpu.pipeline_mode<synchronous>, transform_indices = @transform_4, window_bounds = array<i64: 1, 32>}, {pipeline_mode = #tpu.pipeline_mode<synchronous>, transform_indices = @transform_5, window_bounds = array<i64: 32, 256>}, {pipeline_mode = #tpu.pipeline_mode<synchronous>, transform_indices = @transform_6, window_bounds = array<i64: 1, 256>}, {pipeline_mode = #tpu.pipeline_mode<synchronous>, transform_indices = @transform_7, window_bounds = array<i64: 256, 8>}, {pipeline_mode = #tpu.pipeline_mode<synchronous>, transform_indices = @transform_8, window_bounds = array<i64: 1, 8>}, {pipeline_mode = #tpu.pipeline_mode<synchronous>, transform_indices = @transform_9, window_bounds = array<i64: 32, 128>}, {pipeline_mode = #tpu.pipeline_mode<synchronous>, transform_indices = @transform_10, window_bounds = array<i64: 1, 128>}, {transform_indices = @transform_11, window_bounds = array<i64: 2, 8, 32>}, {transform_indices = @transform_12, window_bounds = array<i64: 2, 8>}]} {
    %c0 = arith.constant 0 : index
    %c0_0 = arith.constant 0 : index
    %0 = vector.load %arg1[%c0, %c0_0] : memref<16x1xi32, #tpu.memory_space<vmem>>, vector<16x1xi32>
    %1 = tpu.iota {dimensions = array<i32: 1>} : vector<16x64xi32>
    %2 = vector.broadcast %0 : vector<16x1xi32> to vector<16x64xi32>
    %3 = arith.cmpi eq, %2, %1 : vector<16x64xi32>
    %4 = arith.extui %3 : vector<16x64xi1> to vector<16x64xi32>
    %5 = arith.sitofp %4 : vector<16x64xi32> to vector<16x64xf32>
    %c0_1 = arith.constant 0 : index
    %c0_2 = arith.constant 0 : index
    %6 = vector.load %arg2[%c0_1, %c0_2] : memref<64x32xf32, #tpu.memory_space<vmem>>, vector<64x32xf32>
    %cst = arith.constant dense<0.000000e+00> : vector<16x32xf32>
    %7 = tpu.matmul %5, %6, %cst {dimension_numbers = #tpu.dot_dimension_numbers<[1], [0], [0], [1], [0, 0, 1, 1], [], []>} : vector<16x64xf32>, vector<64x32xf32>, vector<16x32xf32> -> vector<16x32xf32>
    %8 = vector.shape_cast %7 : vector<16x32xf32> to vector<2x8x32xf32>
    %c0_3 = arith.constant 0 : index
    %c0_4 = arith.constant 0 : index
    %9 = vector.load %arg3[%c0_3, %c0_4] : memref<8x32xf32, #tpu.memory_space<vmem>>, vector<8x32xf32>
    %10 = vector.shape_cast %9 : vector<8x32xf32> to vector<1x8x32xf32>
    %11 = vector.broadcast %10 : vector<1x8x32xf32> to vector<2x8x32xf32>
    %12 = arith.addf %8, %11 : vector<2x8x32xf32>
    %cst_5 = arith.constant dense<0.000000e+00> : vector<2x8xf32>
    %13 = vector.multi_reduction <add>, %12, %cst_5 [2] : vector<2x8x32xf32> to vector<2x8xf32>
    %14 = vector.shape_cast %13 : vector<2x8xf32> to vector<2x8x1xf32>
    %cst_6 = arith.constant 3.200000e+01 : f32
    %15 = vector.broadcast %cst_6 : f32 to vector<2x8x1xf32>
    %16 = arith.divf %14, %15 : vector<2x8x1xf32>
    %17 = vector.broadcast %16 : vector<2x8x1xf32> to vector<2x8x32xf32>
    %18 = arith.subf %12, %17 : vector<2x8x32xf32>
    %19 = arith.mulf %18, %18 : vector<2x8x32xf32>
    %cst_7 = arith.constant dense<0.000000e+00> : vector<2x8xf32>
    %20 = vector.multi_reduction <add>, %19, %cst_7 [2] : vector<2x8x32xf32> to vector<2x8xf32>
    %21 = vector.shape_cast %20 : vector<2x8xf32> to vector<2x8x1xf32>
    %cst_8 = arith.constant 3.200000e+01 : f32
    %22 = vector.broadcast %cst_8 : f32 to vector<2x8x1xf32>
    %23 = arith.divf %21, %22 : vector<2x8x1xf32>
    %24 = vector.broadcast %16 : vector<2x8x1xf32> to vector<2x8x32xf32>
    %25 = arith.subf %12, %24 : vector<2x8x32xf32>
    %cst_9 = arith.constant 9.99999996E-13 : f32
    %26 = vector.broadcast %cst_9 : f32 to vector<2x8x1xf32>
    %27 = arith.addf %23, %26 : vector<2x8x1xf32>
    %28 = math.rsqrt %27 : vector<2x8x1xf32>
    %29 = vector.broadcast %28 : vector<2x8x1xf32> to vector<2x8x32xf32>
    %30 = arith.mulf %25, %29 : vector<2x8x32xf32>
    %c0_10 = arith.constant 0 : index
    %c0_11 = arith.constant 0 : index
    %31 = vector.load %arg4[%c0_10, %c0_11] : memref<1x32xf32, #tpu.memory_space<vmem>>, vector<1x32xf32>
    %32 = vector.shape_cast %31 : vector<1x32xf32> to vector<1x1x32xf32>
    %33 = vector.broadcast %32 : vector<1x1x32xf32> to vector<2x8x32xf32>
    %34 = arith.mulf %30, %33 : vector<2x8x32xf32>
    %c0_12 = arith.constant 0 : index
    %c0_13 = arith.constant 0 : index
    %35 = vector.load %arg5[%c0_12, %c0_13] : memref<1x32xf32, #tpu.memory_space<vmem>>, vector<1x32xf32>
    %36 = vector.shape_cast %35 : vector<1x32xf32> to vector<1x1x32xf32>
    %37 = vector.broadcast %36 : vector<1x1x32xf32> to vector<2x8x32xf32>
    %38 = arith.addf %34, %37 : vector<2x8x32xf32>
    %cst_14 = arith.constant dense<0.000000e+00> : vector<2x32xf32>
    %39 = vector.multi_reduction <add>, %38, %cst_14 [1] : vector<2x8x32xf32> to vector<2x32xf32>
    %cst_15 = arith.constant 8.000000e+00 : f32
    %40 = vector.broadcast %cst_15 : f32 to vector<2x32xf32>
    %41 = arith.divf %39, %40 : vector<2x32xf32>
    %c0_16 = arith.constant 0 : index
    %c0_17 = arith.constant 0 : index
    %42 = vector.load %arg6[%c0_16, %c0_17] : memref<32x256xf32, #tpu.memory_space<vmem>>, vector<32x256xf32>
    %cst_18 = arith.constant dense<0.000000e+00> : vector<2x256xf32>
    %43 = tpu.matmul %41, %42, %cst_18 {dimension_numbers = #tpu.dot_dimension_numbers<[1], [0], [0], [1], [0, 0, 1, 1], [], []>} : vector<2x32xf32>, vector<32x256xf32>, vector<2x256xf32> -> vector<2x256xf32>
    %c0_19 = arith.constant 0 : index
    %c0_20 = arith.constant 0 : index
    %44 = vector.load %arg7[%c0_19, %c0_20] : memref<1x256xf32, #tpu.memory_space<vmem>>, vector<1x256xf32>
    %45 = vector.broadcast %44 : vector<1x256xf32> to vector<2x256xf32>
    %46 = arith.addf %43, %45 : vector<2x256xf32>
    %cst_21 = arith.constant 0.000000e+00 : f32
    %47 = vector.broadcast %cst_21 : f32 to vector<2x256xf32>
    %48 = arith.maximumf %46, %47 : vector<2x256xf32>
    %c0_22 = arith.constant 0 : index
    %c0_23 = arith.constant 0 : index
    %49 = vector.load %arg8[%c0_22, %c0_23] : memref<256x8xf32, #tpu.memory_space<vmem>>, vector<256x8xf32>
    %cst_24 = arith.constant dense<0.000000e+00> : vector<2x8xf32>
    %50 = tpu.matmul %48, %49, %cst_24 {dimension_numbers = #tpu.dot_dimension_numbers<[1], [0], [0], [1], [0, 0, 1, 1], [], []>} : vector<2x256xf32>, vector<256x8xf32>, vector<2x8xf32> -> vector<2x8xf32>
    %c0_25 = arith.constant 0 : index
    %c0_26 = arith.constant 0 : index
    %51 = vector.load %arg9[%c0_25, %c0_26] : memref<1x8xf32, #tpu.memory_space<vmem>>, vector<1x8xf32>
    %52 = vector.broadcast %51 : vector<1x8xf32> to vector<2x8xf32>
    %53 = arith.addf %50, %52 : vector<2x8xf32>
    %cst_27 = arith.constant dense<0xFF800000> : vector<2xf32>
    %54 = vector.multi_reduction <maximumf>, %53, %cst_27 [1] : vector<2x8xf32> to vector<2xf32>
    %55 = vector.shape_cast %54 : vector<2xf32> to vector<2x1xf32>
    %56 = vector.broadcast %55 : vector<2x1xf32> to vector<2x8xf32>
    %57 = arith.subf %53, %56 : vector<2x8xf32>
    %58 = math.exp %57 : vector<2x8xf32>
    %cst_28 = arith.constant dense<0.000000e+00> : vector<2xf32>
    %59 = vector.multi_reduction <add>, %58, %cst_28 [1] : vector<2x8xf32> to vector<2xf32>
    %60 = vector.shape_cast %59 : vector<2xf32> to vector<2x1xf32>
    %61 = vector.broadcast %60 : vector<2x1xf32> to vector<2x8xf32>
    %62 = arith.divf %58, %61 : vector<2x8xf32>
    %c0_29 = arith.constant 0 : index
    %c0_30 = arith.constant 0 : index
    %63 = vector.load %arg13[%c0_29, %c0_30] : memref<2x8xf32, #tpu.memory_space<vmem>>, vector<2x8xf32>
    tpu.vector_store %arg13[%c0_29, %c0_30], %62 {strides = array<i32>} : memref<2x8xf32, #tpu.memory_space<vmem>>, vector<2x8xf32>,
    %c0_31 = arith.constant 0 : index
    %c0_32 = arith.constant 0 : index
    %64 = vector.load %arg10[%c0_31, %c0_32] : memref<32x128xf32, #tpu.memory_space<vmem>>, vector<32x128xf32>
    %cst_33 = arith.constant dense<0.000000e+00> : vector<16x128xf32>
    %65 = tpu.matmul %7, %64, %cst_33 {dimension_numbers = #tpu.dot_dimension_numbers<[1], [0], [0], [1], [0, 0, 1, 1], [], []>} : vector<16x32xf32>, vector<32x128xf32>, vector<16x128xf32> -> vector<16x128xf32>
    %c0_34 = arith.constant 0 : index
    %c0_35 = arith.constant 0 : index
    %66 = vector.load %arg11[%c0_34, %c0_35] : memref<1x128xf32, #tpu.memory_space<vmem>>, vector<1x128xf32>
    %67 = vector.broadcast %66 : vector<1x128xf32> to vector<16x128xf32>
    %68 = arith.addf %65, %67 : vector<16x128xf32>
    %69 = math.tanh %68 : vector<16x128xf32>
    %70 = vector.shape_cast %69 : vector<16x128xf32> to vector<2x8x128xf32>
    %71 = vector.extract_strided_slice %62 {offsets = [0, 0], sizes = [2, 1], strides = [1, 1]} : vector<2x8xf32> to vector<2x1xf32>
    %72 = vector.shape_cast %71 : vector<2x1xf32> to vector<2x1x1xf32>
    %73 = vector.extract_strided_slice %70 {offsets = [0, 0, 0], sizes = [2, 8, 32], strides = [1, 1, 1]} : vector<2x8x128xf32> to vector<2x8x32xf32>
    %74 = vector.broadcast %72 : vector<2x1x1xf32> to vector<2x8x32xf32>
    %75 = arith.mulf %74, %73 : vector<2x8x32xf32>
    %76 = vector.extract_strided_slice %62 {offsets = [0, 1], sizes = [2, 1], strides = [1, 1]} : vector<2x8xf32> to vector<2x1xf32>
    %77 = vector.shape_cast %76 : vector<2x1xf32> to vector<2x1x1xf32>
    %78 = vector.extract_strided_slice %70 {offsets = [0, 0, 32], sizes = [2, 8, 32], strides = [1, 1, 1]} : vector<2x8x128xf32> to vector<2x8x32xf32>
    %79 = vector.broadcast %77 : vector<2x1x1xf32> to vector<2x8x32xf32>
    %80 = arith.mulf %79, %78 : vector<2x8x32xf32>
    %81 = arith.addf %75, %80 : vector<2x8x32xf32>
    %82 = vector.extract_strided_slice %62 {offsets = [0, 2], sizes = [2, 1], strides = [1, 1]} : vector<2x8xf32> to vector<2x1xf32>
    %83 = vector.shape_cast %82 : vector<2x1xf32> to vector<2x1x1xf32>
    %84 = vector.extract_strided_slice %70 {offsets = [0, 0, 64], sizes = [2, 8, 32], strides = [1, 1, 1]} : vector<2x8x128xf32> to vector<2x8x32xf32>
    %85 = vector.broadcast %83 : vector<2x1x1xf32> to vector<2x8x32xf32>
    %86 = arith.mulf %85, %84 : vector<2x8x32xf32>
    %87 = arith.addf %81, %86 : vector<2x8x32xf32>
    %c0_36 = arith.constant 0 : index
    %c0_37 = arith.constant 0 : index
    %c0_38 = arith.constant 0 : index
    %88 = vector.load %arg12[%c0_36, %c0_37, %c0_38] : memref<2x8x32xf32, #tpu.memory_space<vmem>>, vector<2x8x32xf32>
    tpu.vector_store %arg12[%c0_36, %c0_37, %c0_38], %87 {strides = array<i32>} : memref<2x8x32xf32, #tpu.memory_space<vmem>>, vector<2x8x32xf32>,
    return
  }
  func.func @transform_0(%arg0: i32) -> (i32, i32) {
    %c0_i32 = arith.constant 0 : i32
    %c0_i32_0 = arith.constant 0 : i32
    return %arg0, %c0_i32 : i32, i32
  }
  func.func @transform_1(%arg0: i32) -> (i32, i32) {
    %c0_i32 = arith.constant 0 : i32
    %c0_i32_0 = arith.constant 0 : i32
    %c0_i32_1 = arith.constant 0 : i32
    return %c0_i32, %c0_i32_0 : i32, i32
  }
  func.func @transform_2(%arg0: i32) -> (i32, i32) {
    %c0_i32 = arith.constant 0 : i32
    %c0_i32_0 = arith.constant 0 : i32
    %c0_i32_1 = arith.constant 0 : i32
    return %c0_i32, %c0_i32_0 : i32, i32
  }
  func.func @transform_3(%arg0: i32) -> (i32, i32) {
    %c0_i32 = arith.constant 0 : i32
    %c0_i32_0 = arith.constant 0 : i32
    %c0_i32_1 = arith.constant 0 : i32
    return %c0_i32, %c0_i32_0 : i32, i32
  }
  func.func @transform_4(%arg0: i32) -> (i32, i32) {
    %c0_i32 = arith.constant 0 : i32
    %c0_i32_0 = arith.constant 0 : i32
    %c0_i32_1 = arith.constant 0 : i32
    return %c0_i32, %c0_i32_0 : i32, i32
  }
  func.func @transform_5(%arg0: i32) -> (i32, i32) {
    %c0_i32 = arith.constant 0 : i32
    %c0_i32_0 = arith.constant 0 : i32
    %c0_i32_1 = arith.constant 0 : i32
    return %c0_i32, %c0_i32_0 : i32, i32
  }
  func.func @transform_6(%arg0: i32) -> (i32, i32) {
    %c0_i32 = arith.constant 0 : i32
    %c0_i32_0 = arith.constant 0 : i32
    %c0_i32_1 = arith.constant 0 : i32
    return %c0_i32, %c0_i32_0 : i32, i32
  }
  func.func @transform_7(%arg0: i32) -> (i32, i32) {
    %c0_i32 = arith.constant 0 : i32
    %c0_i32_0 = arith.constant 0 : i32
    %c0_i32_1 = arith.constant 0 : i32
    return %c0_i32, %c0_i32_0 : i32, i32
  }
  func.func @transform_8(%arg0: i32) -> (i32, i32) {
    %c0_i32 = arith.constant 0 : i32
    %c0_i32_0 = arith.constant 0 : i32
    %c0_i32_1 = arith.constant 0 : i32
    return %c0_i32, %c0_i32_0 : i32, i32
  }
  func.func @transform_9(%arg0: i32) -> (i32, i32) {
    %c0_i32 = arith.constant 0 : i32
    %c0_i32_0 = arith.constant 0 : i32
    %c0_i32_1 = arith.constant 0 : i32
    return %c0_i32, %c0_i32_0 : i32, i32
  }
  func.func @transform_10(%arg0: i32) -> (i32, i32) {
    %c0_i32 = arith.constant 0 : i32
    %c0_i32_0 = arith.constant 0 : i32
    %c0_i32_1 = arith.constant 0 : i32
    return %c0_i32, %c0_i32_0 : i32, i32
  }
  func.func @transform_11(%arg0: i32) -> (i32, i32, i32) {
    %c0_i32 = arith.constant 0 : i32
    %c0_i32_0 = arith.constant 0 : i32
    %c0_i32_1 = arith.constant 0 : i32
    return %arg0, %c0_i32, %c0_i32_0 : i32, i32, i32
  }
  func.func @transform_12(%arg0: i32) -> (i32, i32) {
    %c0_i32 = arith.constant 0 : i32
    %c0_i32_0 = arith.constant 0 : i32
    return %arg0, %c0_i32 : i32, i32
  }
}

</mosaic_0001>

<llo_original>
// kernel: tpu_custom_call.1
$region0: #{tpu_custom_call.1}
  #allocation0 [shape = 'u32[]', space=smem, size = 0x4, offset = 0x4, fixed_abs, tag = 'smem constant byte address 0x4 - core index']
  #allocation1 [shape = 'u32[144,128]{1,0:T(1,128)}', space=vmem, size = 0x12000, scoped, tag = 'internal scratch']
  %s0 = inlined_call_operand.vmem [shape: s32[16,1], index: 0, kind: input, shape index: {}]
  %s1 = inlined_call_operand.vmem [shape: f32[64,32], index: 1, kind: input, shape index: {}]
  %s2 = inlined_call_operand.vmem [shape: f32[8,32], index: 2, kind: input, shape index: {}]
  %s3 = inlined_call_operand.vmem [shape: f32[1,32], index: 3, kind: input, shape index: {}]
  %s4 = inlined_call_operand.vmem [shape: f32[1,32], index: 4, kind: input, shape index: {}]
  %s5 = inlined_call_operand.vmem [shape: f32[32,256], index: 5, kind: input, shape index: {}]
  %s6 = inlined_call_operand.vmem [shape: f32[1,256], index: 6, kind: input, shape index: {}]
  %s7 = inlined_call_operand.vmem [shape: f32[256,8], index: 7, kind: input, shape index: {}]
  %s8 = inlined_call_operand.vmem [shape: f32[1,8], index: 8, kind: input, shape index: {}]
  %s9 = inlined_call_operand.vmem [shape: f32[32,128], index: 9, kind: input, shape index: {}]
  %s10 = inlined_call_operand.vmem [shape: f32[1,128], index: 10, kind: input, shape index: {}]
  %s11 = inlined_call_operand.hbm [shape: f32[2,8,32], index: 11, kind: output, shape index: {0}]
  %s12 = inlined_call_operand.hbm [shape: f32[2,8], index: 12, kind: output, shape index: {1}]
  %13 = xla_tuple %s11, %s12
  %s14 = sld [smem:[#allocation0]]
  $region62: #{tpu_custom_call.1} parent=0
    _
  %s16 = ssub.s32 1, %s14
  %s17 = scalar_select 0, %s16, %s14
  $region1: #{tpu_custom_call.1} parent=0
    #allocation2 [shape = 'u8[8192]{0}', space=vmem, size = 0x2000, scoped, tag = 'output window, operand 0, single buffered']
    #allocation3 [shape = 's32[1]{0}', space=sflag, size = 0x4, scoped, tag = 'scoped memory for tpu_custom_call.1']
    #allocation4 [shape = 'u8[1024]{0}', space=vmem, size = 0x400, scoped, tag = 'output window, operand 1, single buffered']
    #allocation5 [shape = 's32[1]{0}', space=sflag, size = 0x4, scoped, tag = 'scoped memory for tpu_custom_call.1']
    %18 = vsyncpa [#allocation3], 0
    %19 = vsyncpa [#allocation5], 0
    // Predicated region
    $region2: #{tpu_custom_call.1} parent=1 // pred_check
      _
    $region3: #{tpu_custom_call.1} parent=1 // pred_check_branch
      %21 = sbr.rel (0) target = $region5
    $region4: #{tpu_custom_call.1} parent=1 // pred_region
      _
    $region5: #{tpu_custom_call.1} parent=1 // pred_fallthru
      _
    // Predicated region
    $region6: #{tpu_custom_call.1} parent=1 // pred_check
      _
    $region7: #{tpu_custom_call.1} parent=1 // pred_check_branch
      %23 = sbr.rel (0) target = $region9
    $region8: #{tpu_custom_call.1} parent=1 // pred_region
      _
    $region9: #{tpu_custom_call.1} parent=1 // pred_fallthru
      _
    // Predicated region
    $region10: #{tpu_custom_call.1} parent=1 // pred_check
      _
    $region11: #{tpu_custom_call.1} parent=1 // pred_check_branch
      %25 = sbr.rel (0) target = $region13
    $region12: #{tpu_custom_call.1} parent=1 // pred_region
      _
    $region13: #{tpu_custom_call.1} parent=1 // pred_fallthru
      _
    // Predicated region
    $region14: #{tpu_custom_call.1} parent=1 // pred_check
      _
    $region15: #{tpu_custom_call.1} parent=1 // pred_check_branch
      %27 = sbr.rel (0) target = $region17
    $region16: #{tpu_custom_call.1} parent=1 // pred_region
      _
    $region17: #{tpu_custom_call.1} parent=1 // pred_fallthru
      _
    // Predicated region
    $region18: #{tpu_custom_call.1} parent=1 // pred_check
      _
    $region19: #{tpu_custom_call.1} parent=1 // pred_check_branch
      %29 = sbr.rel (0) target = $region21
    $region20: #{tpu_custom_call.1} parent=1 // pred_region
      _
    $region21: #{tpu_custom_call.1} parent=1 // pred_fallthru
      _
    // Predicated region
    $region22: #{tpu_custom_call.1} parent=1 // pred_check
      _
    $region23: #{tpu_custom_call.1} parent=1 // pred_check_branch
      %31 = sbr.rel (0) target = $region25
    $region24: #{tpu_custom_call.1} parent=1 // pred_region
      _
    $region25: #{tpu_custom_call.1} parent=1 // pred_fallthru
      _
    // Predicated region
    $region26: #{tpu_custom_call.1} parent=1 // pred_check
      _
    $region27: #{tpu_custom_call.1} parent=1 // pred_check_branch
      %33 = sbr.rel (0) target = $region29
    $region28: #{tpu_custom_call.1} parent=1 // pred_region
      _
    $region29: #{tpu_custom_call.1} parent=1 // pred_fallthru
      _
    // Predicated region
    $region30: #{tpu_custom_call.1} parent=1 // pred_check
      _
    $region31: #{tpu_custom_call.1} parent=1 // pred_check_branch
      %35 = sbr.rel (0) target = $region33
    $region32: #{tpu_custom_call.1} parent=1 // pred_region
      _
    $region33: #{tpu_custom_call.1} parent=1 // pred_fallthru
      _
    // Predicated region
    $region34: #{tpu_custom_call.1} parent=1 // pred_check
      _
    $region35: #{tpu_custom_call.1} parent=1 // pred_check_branch
      %37 = sbr.rel (0) target = $region37
    $region36: #{tpu_custom_call.1} parent=1 // pred_region
      _
    $region37: #{tpu_custom_call.1} parent=1 // pred_fallthru
      _
    // Predicated region
    $region38: #{tpu_custom_call.1} parent=1 // pred_check
      _
    $region39: #{tpu_custom_call.1} parent=1 // pred_check_branch
      %39 = sbr.rel (0) target = $region41
    $region40: #{tpu_custom_call.1} parent=1 // pred_region
      _
    $region41: #{tpu_custom_call.1} parent=1 // pred_fallthru
      _
    // Predicated region
    $region42: #{tpu_custom_call.1} parent=1 // pred_check
      _
    $region43: #{tpu_custom_call.1} parent=1 // pred_check_branch
      %41 = sbr.rel (0) target = $region45
    $region44: #{tpu_custom_call.1} parent=1 // pred_region
      _
    $region45: #{tpu_custom_call.1} parent=1 // pred_fallthru
      _
    %v42 = vld [vmem:[%s0] sm:$0xff]
    %v43 = vld [vmem:[%s0 + $0x8] sm:$0xff]
    %v44 = vlaneseq
    %v45 = vand.u32 %v44, 127
    %46 = vset.pattern.permute.xlu0 0
    %47 = vperm.xlu0 %46, %v42
    %v48 = vpop.permute.xlu0 %47
    %49 = vset.pattern.permute.xlu0 0
    %50 = vperm.xlu0 %49, %v43
    %v51 = vpop.permute.xlu0 %50
    %vm52 = vcmp.eq.s32.totalorder %v48, %v45
    %vm53 = vcmp.eq.s32.totalorder %v51, %v45
    %v54 = vsel %vm52, 1, 0
    %v55 = vsel %vm53, 1, 0
    %v56 = vcvt.s32.f32 %v54
    %v57 = vcvt.s32.f32 %v55
    %v58 = vld [vmem:[%s1] sm:$0xff]
    %v59 = vld [vmem:[%s1 + $0x8] sm:$0xff]
    %v60 = vld [vmem:[%s1 + $0x10] sm:$0xff]
    %v61 = vld [vmem:[%s1 + $0x18] sm:$0xff]
    %v62 = vld [vmem:[%s1 + $0x20] sm:$0xff]
    %v63 = vld [vmem:[%s1 + $0x28] sm:$0xff]
    %v64 = vld [vmem:[%s1 + $0x30] sm:$0xff]
    %v65 = vld [vmem:[%s1 + $0x38] sm:$0xff]
    %vm66 = vcmask 523264
    %v68 = vsel %vm66, %v56, 0
    %v71 = vsel %vm66, %v57, 0
    %73 = vmatprep.subr.mxu0 0.0
    %74 = vmatpush1.msra.mxu0 %v58
    %75 = vmatprep.subr.mxu0 0.0
    %76 = vmatpush1.msra.mxu0 %v59
    %77 = vmatprep.subr.mxu0 0.0
    %78 = vmatpush1.msra.mxu0 %v60
    %79 = vmatprep.subr.mxu0 0.0
    %80 = vmatpush1.msra.mxu0 %v61
    %81 = vmatprep.subr.mxu0 0.0
    %82 = vmatpush1.msra.mxu0 %v62
    %83 = vmatprep.subr.mxu0 0.0
    %84 = vmatpush1.msra.mxu0 %v63
    %85 = vmatprep.subr.mxu0 0.0
    %86 = vmatpush1.msra.mxu0 %v64
    %87 = vmatprep.subr.mxu0 0.0
    %88 = vmatpush1.msra.mxu0 %v65
    %89 = vmatprep.subr.mxu0 0.0
    %90 = vmatpush1.msra.mxu0 0.0
    %91 = vmatprep.subr.mxu0 0.0
    %92 = vmatpush1.msra.mxu0 0.0
    %93 = vmatprep.subr.mxu0 0.0
    %94 = vmatpush1.msra.mxu0 0.0
    %95 = vmatprep.subr.mxu0 0.0
    %96 = vmatpush1.msra.mxu0 0.0
    %97 = vmatprep.subr.mxu0 0.0
    %98 = vmatpush1.msra.mxu0 0.0
    %99 = vmatprep.subr.mxu0 0.0
    %100 = vmatpush1.msra.mxu0 0.0
    %101 = vmatprep.subr.mxu0 0.0
    %102 = vmatpush1.msra.mxu0 0.0
    %103 = vmatprep.subr.mxu0 0.0
    %104 = vmatpush1.msra.mxu0 0.0
    %105 = vmatprep.subr.mxu0 0.0
    %106 = vmatpush1.msra.mxu0 0.0
    %107 = vmatprep.subr.mxu0 0.0
    %108 = vmatpush1.msra.mxu0 0.0
    %109 = vmatprep.subr.mxu0 0.0
    %110 = vmatpush1.msra.mxu0 0.0
    %111 = vmatprep.subr.mxu0 0.0
    %112 = vmatpush1.msra.mxu0 0.0
    %113 = vmatprep.subr.mxu0 0.0
    %114 = vmatpush1.msra.mxu0 0.0
    %115 = vmatprep.subr.mxu0 0.0
    %116 = vmatpush1.msra.mxu0 0.0
    %117 = vmatprep.subr.mxu0 0.0
    %118 = vmatpush1.msra.mxu0 0.0
    %119 = vmatprep.subr.mxu0 0.0
    %120 = vmatpush1.msra.mxu0 0.0
    %121 = vmatprep.subr.mxu0 0.0
    %122 = vmatpush1.msra.mxu0 0.0
    %123 = vmatprep.subr.mxu0 0.0
    %124 = vmatpush1.msra.mxu0 0.0
    %125 = vmatprep.subr.mxu0 0.0
    %126 = vmatpush1.msra.mxu0 0.0
    %127 = vmatprep.subr.mxu0 0.0
    %128 = vmatpush1.msra.mxu0 0.0
    %129 = vmatprep.subr.mxu0 0.0
    %130 = vmatpush1.msra.mxu0 0.0
    %131 = vmatprep.subr.mxu0 0.0
    %132 = vmatpush1.msra.mxu0 0.0
    %133 = vmatprep.subr.mxu0 0.0
    %134 = vmatpush1.msra.mxu0 0.0
    %135 = vmatprep.subr.mxu0 0.0
    %136 = vmatpush1.msra.mxu0 0.0
    %137 = vmatprep.mubr.f32.mxu0 0.0
    %138 = vmatmul.mubr.f32.gmra.mrb[0].mxu0 %v68
    %v139 = vpop.f32.mrb[0].mxu0
    %v140 = vadd.f32 0.0, %v139
    %v141 = vpop.f32.mrb[0].mxu0
    %142 = vmatprep.mubr.f32.mxu0 0.0
    %143 = vmatmul.mubr.f32.gmra.mrb[0].mxu0 %v71
    %v144 = vpop.f32.mrb[0].mxu0
    %v145 = vadd.f32 0.0, %v144
    %v146 = vpop.f32.mrb[0].mxu0
    %147 = vdwg.mxu0
    %v148 = vld [vmem:[%s2] sm:$0xff]
    %v149 = vadd.f32 %v140, %v148
    %v150 = vadd.f32 %v145, %v148
    %vm151 = vcmask 261120
    %v152 = vsel %vm151, %v149, 0.0
    %153 = vadd.xlane.f32.xlu0 %v152
    %v154 = vpop.xlane.xlu0 %153
    %v155 = vsel %vm151, %v150, 0.0
    %156 = vadd.xlane.f32.xlu0 %v155
    %v157 = vpop.xlane.xlu0 %156
    %v158 = vrcp.pop 32.0
    %v159 = vmul.f32 %v154, %v158
    %v160 = vmul.f32 %v157, %v158
    %v161 = vsub.f32 %v149, %v159
    %v162 = vsub.f32 %v150, %v160
    %v163 = vmul.f32 %v161, %v161
    %v164 = vmul.f32 %v162, %v162
    %v165 = vsel %vm151, %v163, 0.0
    %166 = vadd.xlane.f32.xlu0 %v165
    %v167 = vpop.xlane.xlu0 %166
    %v168 = vsel %vm151, %v164, 0.0
    %169 = vadd.xlane.f32.xlu0 %v168
    %v170 = vpop.xlane.xlu0 %169
    %v171 = vmul.f32 %v167, %v158
    %v172 = vmul.f32 %v170, %v158
    %v173 = vadd.f32 %v171, 1e-12
    %v174 = vadd.f32 %v172, 1e-12
    %v175 = vrsqrt.pop %v173
    %v176 = vrsqrt.pop %v174
    %v177 = vmul.f32 %v161, %v175
    %v178 = vmul.f32 %v162, %v176
    %v179 = vld [vmem:[%s3] sm:$0x1]
    %v181 = vlaneseq
    %v182 = vshrl.u32 %v181, 7
    %v183 = vsub.s32 0, %v182
    %v184 = vrot.slane %v179, %v183
    %v186 = vmul.f32 %v177, %v184
    %v187 = vmul.f32 %v178, %v184
    %v188 = vld [vmem:[%s4] sm:$0x1]
    %v190 = vlaneseq
    %v191 = vshrl.u32 %v190, 7
    %v192 = vsub.s32 0, %v191
    %v193 = vrot.slane %v188, %v192
    %v195 = vadd.f32 %v186, %v193
    %v196 = vadd.f32 %v187, %v193
    %v197 = vsel %vm151, %v195, 0.0
    %v198 = vrot.slane %v197, 4
    %v199 = vadd.f32 %v197, %v198
    %v200 = vrot.slane %v199, 2
    %v201 = vadd.f32 %v199, %v200
    %v202 = vrot.slane %v201, 1
    %v203 = vadd.f32 %v201, %v202
    %v204 = vsel %vm151, %v196, 0.0
    %v205 = vrot.slane %v204, 4
    %v206 = vadd.f32 %v204, %v205
    %v207 = vrot.slane %v206, 2
    %v208 = vadd.f32 %v206, %v207
    %v209 = vrot.slane %v208, 1
    %v210 = vadd.f32 %v208, %v209
    %v211 = vrcp.pop 8.0
    %v212 = vmul.f32 %v203, %v211
    %v213 = vmul.f32 %v210, %v211
    %v214 = vld [vmem:[%s5] sm:$0xff]
    %v215 = vld [vmem:[%s5 + $0x8] sm:$0xff]
    %v216 = vld [vmem:[%s5 + $0x10] sm:$0xff]
    %v217 = vld [vmem:[%s5 + $0x18] sm:$0xff]
    %v218 = vld [vmem:[%s5 + $0x20] sm:$0xff]
    %v219 = vld [vmem:[%s5 + $0x28] sm:$0xff]
    %v220 = vld [vmem:[%s5 + $0x30] sm:$0xff]
    %v221 = vld [vmem:[%s5 + $0x38] sm:$0xff]
    %v222 = vld [vmem:[%s6] sm:$0x3]
    %v224 = vlaneseq
    %v225 = vshrl.u32 %v224, 7
    %v226 = vsub.s32 0, %v225
    %v227 = vrot.slane %v222, %v226
    %v228 = vlaneseq
    %v229 = vshrl.u32 %v228, 7
    %v230 = vsub.s32 1, %v229
    %v231 = vrot.slane %v222, %v230
    %vm236 = vcmask 1041409
    %v237 = vsel %vm236, %v213, %v212
    %v238 = vsel %vm151, %v237, 0
    %240 = vmatprep.subr.mxu0 %v215
    %241 = vmatpush1.msra.mxu0 %v214
    %242 = vmatprep.subr.mxu0 %v217
    %243 = vmatpush1.msra.mxu0 %v216
    %244 = vmatprep.subr.mxu0 %v219
    %245 = vmatpush1.msra.mxu0 %v218
    %246 = vmatprep.subr.mxu0 %v221
    %247 = vmatpush1.msra.mxu0 %v220
    %248 = vmatprep.subr.mxu0 0.0
    %249 = vmatpush1.msra.mxu0 0.0
    %250 = vmatprep.subr.mxu0 0.0
    %251 = vmatpush1.msra.mxu0 0.0
    %252 = vmatprep.subr.mxu0 0.0
    %253 = vmatpush1.msra.mxu0 0.0
    %254 = vmatprep.subr.mxu0 0.0
    %255 = vmatpush1.msra.mxu0 0.0
    %256 = vmatprep.subr.mxu0 0.0
    %257 = vmatpush1.msra.mxu0 0.0
    %258 = vmatprep.subr.mxu0 0.0
    %259 = vmatpush1.msra.mxu0 0.0
    %260 = vmatprep.subr.mxu0 0.0
    %261 = vmatpush1.msra.mxu0 0.0
    %262 = vmatprep.subr.mxu0 0.0
    %263 = vmatpush1.msra.mxu0 0.0
    %264 = vmatprep.subr.mxu0 0.0
    %265 = vmatpush1.msra.mxu0 0.0
    %266 = vmatprep.subr.mxu0 0.0
    %267 = vmatpush1.msra.mxu0 0.0
    %268 = vmatprep.subr.mxu0 0.0
    %269 = vmatpush1.msra.mxu0 0.0
    %270 = vmatprep.subr.mxu0 0.0
    %271 = vmatpush1.msra.mxu0 0.0
    %272 = vmatprep.subr.mxu0 0.0
    %273 = vmatpush1.msra.mxu0 0.0
    %274 = vmatprep.subr.mxu0 0.0
    %275 = vmatpush1.msra.mxu0 0.0
    %276 = vmatprep.subr.mxu0 0.0
    %277 = vmatpush1.msra.mxu0 0.0
    %278 = vmatprep.subr.mxu0 0.0
    %279 = vmatpush1.msra.mxu0 0.0
    %280 = vmatprep.subr.mxu0 0.0
    %281 = vmatpush1.msra.mxu0 0.0
    %282 = vmatprep.subr.mxu0 0.0
    %283 = vmatpush1.msra.mxu0 0.0
    %284 = vmatprep.subr.mxu0 0.0
    %285 = vmatpush1.msra.mxu0 0.0
    %286 = vmatprep.subr.mxu0 0.0
    %287 = vmatpush1.msra.mxu0 0.0
    %288 = vmatprep.subr.mxu0 0.0
    %289 = vmatpush1.msra.mxu0 0.0
    %290 = vmatprep.subr.mxu0 0.0
    %291 = vmatpush1.msra.mxu0 0.0
    %292 = vmatprep.subr.mxu0 0.0
    %293 = vmatpush1.msra.mxu0 0.0
    %294 = vmatprep.subr.mxu0 0.0
    %295 = vmatpush1.msra.mxu0 0.0
    %296 = vmatprep.subr.mxu0 0.0
    %297 = vmatpush1.msra.mxu0 0.0
    %298 = vmatprep.subr.mxu0 0.0
    %299 = vmatpush1.msra.mxu0 0.0
    %300 = vmatprep.subr.mxu0 0.0
    %301 = vmatpush1.msra.mxu0 0.0
    %302 = vmatprep.subr.mxu0 0.0
    %303 = vmatpush1.msra.mxu0 0.0
    %304 = vmatprep.mubr.f32.mxu0 0.0
    %305 = vmatmul.mubr.f32.gmra.mrb[0].mxu0 %v238
    %v306 = vpop.f32.mrb[0].mxu0
    %v307 = vadd.f32 %v227, %v306
    %v308 = vpop.f32.mrb[0].mxu0
    %v309 = vadd.f32 %v231, %v308
    %310 = vdwg.mxu0
    %v311 = vmax.f32 %v307, 0.0
    %v312 = vmax.f32 %v309, 0.0
    %v313 = vld [vmem:[%s7] sm:$0xff]
    %v314 = vld [vmem:[%s7 + $0x8] sm:$0xff]
    %v315 = vld [vmem:[%s7 + $0x10] sm:$0xff]
    %v316 = vld [vmem:[%s7 + $0x18] sm:$0xff]
    %v317 = vld [vmem:[%s7 + $0x20] sm:$0xff]
    %v318 = vld [vmem:[%s7 + $0x28] sm:$0xff]
    %v319 = vld [vmem:[%s7 + $0x30] sm:$0xff]
    %v320 = vld [vmem:[%s7 + $0x38] sm:$0xff]
    %v321 = vld [vmem:[%s7 + $0x40] sm:$0xff]
    %v322 = vld [vmem:[%s7 + $0x48] sm:$0xff]
    %v323 = vld [vmem:[%s7 + $0x50] sm:$0xff]
    %v324 = vld [vmem:[%s7 + $0x58] sm:$0xff]
    %v325 = vld [vmem:[%s7 + $0x60] sm:$0xff]
    %v326 = vld [vmem:[%s7 + $0x68] sm:$0xff]
    %v327 = vld [vmem:[%s7 + $0x70] sm:$0xff]
    %v328 = vld [vmem:[%s7 + $0x78] sm:$0xff]
    %v329 = vld [vmem:[%s7 + $0x80] sm:$0xff]
    %v330 = vld [vmem:[%s7 + $0x88] sm:$0xff]
    %v331 = vld [vmem:[%s7 + $0x90] sm:$0xff]
    %v332 = vld [vmem:[%s7 + $0x98] sm:$0xff]
    %v333 = vld [vmem:[%s7 + $0xa0] sm:$0xff]
    %v334 = vld [vmem:[%s7 + $0xa8] sm:$0xff]
    %v335 = vld [vmem:[%s7 + $0xb0] sm:$0xff]
    %v336 = vld [vmem:[%s7 + $0xb8] sm:$0xff]
    %v337 = vld [vmem:[%s7 + $0xc0] sm:$0xff]
    %v338 = vld [vmem:[%s7 + $0xc8] sm:$0xff]
    %v339 = vld [vmem:[%s7 + $0xd0] sm:$0xff]
    %v340 = vld [vmem:[%s7 + $0xd8] sm:$0xff]
    %v341 = vld [vmem:[%s7 + $0xe0] sm:$0xff]
    %v342 = vld [vmem:[%s7 + $0xe8] sm:$0xff]
    %v343 = vld [vmem:[%s7 + $0xf0] sm:$0xff]
    %v344 = vld [vmem:[%s7 + $0xf8] sm:$0xff]
    %v345 = vld [vmem:[%s8] sm:$0x1]
    %v347 = vlaneseq
    %v348 = vshrl.u32 %v347, 7
    %v349 = vsub.s32 0, %v348
    %v350 = vrot.slane %v345, %v349
    %352 = vmatprep.subr.mxu0 0.0
    %353 = vmatpush1.msra.mxu0 %v313
    %354 = vmatprep.subr.mxu0 0.0
    %355 = vmatpush1.msra.mxu0 %v314
    %356 = vmatprep.subr.mxu0 0.0
    %357 = vmatpush1.msra.mxu0 %v315
    %358 = vmatprep.subr.mxu0 0.0
    %359 = vmatpush1.msra.mxu0 %v316
    %360 = vmatprep.subr.mxu0 0.0
    %361 = vmatpush1.msra.mxu0 %v317
    %362 = vmatprep.subr.mxu0 0.0
    %363 = vmatpush1.msra.mxu0 %v318
    %364 = vmatprep.subr.mxu0 0.0
    %365 = vmatpush1.msra.mxu0 %v319
    %366 = vmatprep.subr.mxu0 0.0
    %367 = vmatpush1.msra.mxu0 %v320
    %368 = vmatprep.subr.mxu0 0.0
    %369 = vmatpush1.msra.mxu0 %v321
    %370 = vmatprep.subr.mxu0 0.0
    %371 = vmatpush1.msra.mxu0 %v322
    %372 = vmatprep.subr.mxu0 0.0
    %373 = vmatpush1.msra.mxu0 %v323
    %374 = vmatprep.subr.mxu0 0.0
    %375 = vmatpush1.msra.mxu0 %v324
    %376 = vmatprep.subr.mxu0 0.0
    %377 = vmatpush1.msra.mxu0 %v325
    %378 = vmatprep.subr.mxu0 0.0
    %379 = vmatpush1.msra.mxu0 %v326
    %380 = vmatprep.subr.mxu0 0.0
    %381 = vmatpush1.msra.mxu0 %v327
    %382 = vmatprep.subr.mxu0 0.0
    %383 = vmatpush1.msra.mxu0 %v328
    %384 = vmatprep.subr.mxu0 0.0
    %385 = vmatpush1.msra.mxu0 %v329
    %386 = vmatprep.subr.mxu0 0.0
    %387 = vmatpush1.msra.mxu0 %v330
    %388 = vmatprep.subr.mxu0 0.0
    %389 = vmatpush1.msra.mxu0 %v331
    %390 = vmatprep.subr.mxu0 0.0
    %391 = vmatpush1.msra.mxu0 %v332
    %392 = vmatprep.subr.mxu0 0.0
    %393 = vmatpush1.msra.mxu0 %v333
    %394 = vmatprep.subr.mxu0 0.0
    %395 = vmatpush1.msra.mxu0 %v334
    %396 = vmatprep.subr.mxu0 0.0
    %397 = vmatpush1.msra.mxu0 %v335
    %398 = vmatprep.subr.mxu0 0.0
    %399 = vmatpush1.msra.mxu0 %v336
    %400 = vmatprep.subr.mxu0 0.0
    %401 = vmatpush1.msra.mxu0 %v337
    %402 = vmatprep.subr.mxu0 0.0
    %403 = vmatpush1.msra.mxu0 %v338
    %404 = vmatprep.subr.mxu0 0.0
    %405 = vmatpush1.msra.mxu0 %v339
    %406 = vmatprep.subr.mxu0 0.0
    %407 = vmatpush1.msra.mxu0 %v340
    %408 = vmatprep.subr.mxu0 0.0
    %409 = vmatpush1.msra.mxu0 %v341
    %410 = vmatprep.subr.mxu0 0.0
    %411 = vmatpush1.msra.mxu0 %v342
    %412 = vmatprep.subr.mxu0 0.0
    %413 = vmatpush1.msra.mxu0 %v343
    %414 = vmatprep.subr.mxu0 0.0
    %415 = vmatpush1.msra.mxu0 %v344
    %416 = vmatprep.mubr.f32.mxu0 %v312
    %417 = vmatmul.mubr.f32.gmra.mrb[0].mxu0 %v311
    %v418 = vpop.f32.mrb[0].mxu0
    %v419 = vadd.f32 %v350, %v418
    %v420 = vpop.f32.mrb[0].mxu0
    %421 = vdwg.mxu0
    %vm422 = vcmask 58368
    %v423 = vsel %vm422, %v419, -inf
    %424 = vmax.xlane.f32.xlu0 %v423
    %v425 = vpop.xlane.xlu0 %424
    %v426 = vsub.f32 %v419, %v425
    %v427 = vmul.f32 %v426, 1.442695
    %v428 = vpow.pop %v427
    %v429 = vsel %vm422, %v428, 0.0
    %430 = vadd.xlane.f32.xlu0 %v429
    %v431 = vpop.xlane.xlu0 %430
    %v432 = vrcp.pop %v431
    %v433 = vmul.f32 %v428, %v432
    %434 = vst.msk [vmem:[#allocation4] sm:$0x3] %vm422, %v433
    %v435 = vld [vmem:[%s9] sm:$0xff]
    %v436 = vld [vmem:[%s9 + $0x8] sm:$0xff]
    %v437 = vld [vmem:[%s9 + $0x10] sm:$0xff]
    %v438 = vld [vmem:[%s9 + $0x18] sm:$0xff]
    %v439 = vld [vmem:[%s10] sm:$0x1]
    %v441 = vlaneseq
    %v442 = vshrl.u32 %v441, 7
    %v443 = vsub.s32 0, %v442
    %v444 = vrot.slane %v439, %v443
    %v447 = vsel %vm151, %v140, 0
    %v450 = vsel %vm151, %v145, 0
    %452 = vmatprep.subr.mxu0 0.0
    %453 = vmatpush1.msra.mxu0 %v435
    %454 = vmatprep.subr.mxu0 0.0
    %455 = vmatpush1.msra.mxu0 %v436
    %456 = vmatprep.subr.mxu0 0.0
    %457 = vmatpush1.msra.mxu0 %v437
    %458 = vmatprep.subr.mxu0 0.0
    %459 = vmatpush1.msra.mxu0 %v438
    %460 = vmatprep.subr.mxu0 0.0
    %461 = vmatpush1.msra.mxu0 0.0
    %462 = vmatprep.subr.mxu0 0.0
    %463 = vmatpush1.msra.mxu0 0.0
    %464 = vmatprep.subr.mxu0 0.0
    %465 = vmatpush1.msra.mxu0 0.0
    %466 = vmatprep.subr.mxu0 0.0
    %467 = vmatpush1.msra.mxu0 0.0
    %468 = vmatprep.subr.mxu0 0.0
    %469 = vmatpush1.msra.mxu0 0.0
    %470 = vmatprep.subr.mxu0 0.0
    %471 = vmatpush1.msra.mxu0 0.0
    %472 = vmatprep.subr.mxu0 0.0
    %473 = vmatpush1.msra.mxu0 0.0
    %474 = vmatprep.subr.mxu0 0.0
    %475 = vmatpush1.msra.mxu0 0.0
    %476 = vmatprep.subr.mxu0 0.0
    %477 = vmatpush1.msra.mxu0 0.0
    %478 = vmatprep.subr.mxu0 0.0
    %479 = vmatpush1.msra.mxu0 0.0
    %480 = vmatprep.subr.mxu0 0.0
    %481 = vmatpush1.msra.mxu0 0.0
    %482 = vmatprep.subr.mxu0 0.0
    %483 = vmatpush1.msra.mxu0 0.0
    %484 = vmatprep.subr.mxu0 0.0
    %485 = vmatpush1.msra.mxu0 0.0
    %486 = vmatprep.subr.mxu0 0.0
    %487 = vmatpush1.msra.mxu0 0.0
    %488 = vmatprep.subr.mxu0 0.0
    %489 = vmatpush1.msra.mxu0 0.0
    %490 = vmatprep.subr.mxu0 0.0
    %491 = vmatpush1.msra.mxu0 0.0
    %492 = vmatprep.subr.mxu0 0.0
    %493 = vmatpush1.msra.mxu0 0.0
    %494 = vmatprep.subr.mxu0 0.0
    %495 = vmatpush1.msra.mxu0 0.0
    %496 = vmatprep.subr.mxu0 0.0
    %497 = vmatpush1.msra.mxu0 0.0
    %498 = vmatprep.subr.mxu0 0.0
    %499 = vmatpush1.msra.mxu0 0.0
    %500 = vmatprep.subr.mxu0 0.0
    %501 = vmatpush1.msra.mxu0 0.0
    %502 = vmatprep.subr.mxu0 0.0
    %503 = vmatpush1.msra.mxu0 0.0
    %504 = vmatprep.subr.mxu0 0.0
    %505 = vmatpush1.msra.mxu0 0.0
    %506 = vmatprep.subr.mxu0 0.0
    %507 = vmatpush1.msra.mxu0 0.0
    %508 = vmatprep.subr.mxu0 0.0
    %509 = vmatpush1.msra.mxu0 0.0
    %510 = vmatprep.subr.mxu0 0.0
    %511 = vmatpush1.msra.mxu0 0.0
    %512 = vmatprep.subr.mxu0 0.0
    %513 = vmatpush1.msra.mxu0 0.0
    %514 = vmatprep.subr.mxu0 0.0
    %515 = vmatpush1.msra.mxu0 0.0
    %516 = vmatprep.mubr.f32.mxu0 0.0
    %517 = vmatmul.mubr.f32.gmra.mrb[0].mxu0 %v447
    %v518 = vpop.f32.mrb[0].mxu0
    %v519 = vadd.f32 %v444, %v518
    %v520 = vpop.f32.mrb[0].mxu0
    %521 = vmatprep.mubr.f32.mxu0 0.0
    %522 = vmatmul.mubr.f32.gmra.mrb[0].mxu0 %v450
    %v523 = vpop.f32.mrb[0].mxu0
    %v524 = vadd.f32 %v444, %v523
    %v525 = vpop.f32.mrb[0].mxu0
    %526 = vdwg.mxu0
    %v527 = vtanh.pop %v519
    %v528 = vtanh.pop %v524
    %v531 = vunpack.c.l.s4 1966171168
    %v532 = vunpack.c.0.s8 %v531
    %v533 = vlaneseq
    %v534 = vshrl.u32 %v533, 7
    %v535 = vsub.s32 %v532, %v534
    %v536 = vrot.slane %v433, %v535
    %v537 = vcombine.high %v536, %v536
    %v539 = vunpack.c.l.s4 1966171168
    %v540 = vunpack.c.0.s8 %v539
    %v541 = vlaneseq
    %v542 = vshrl.u32 %v541, 7
    %v543 = vsub.s32 %v540, %v542
    %v544 = vrot.slane %v536, %v543
    %v546 = vunpack.c.l.s4 1966171168
    %v547 = vunpack.c.0.s8 %v546
    %v548 = vlaneseq
    %v549 = vshrl.u32 %v548, 7
    %v550 = vsub.s32 %v547, %v549
    %v551 = vrot.slane %v537, %v550
    %v552 = vlaneseq
    %v553 = vshrl.u32 %v552, 7
    %v554 = vsub.s32 0, %v553
    %v555 = vrot.slane %v544, %v554
    %v556 = vlaneseq
    %v557 = vshrl.u32 %v556, 7
    %v558 = vsub.s32 0, %v557
    %v559 = vrot.slane %v551, %v558
    %560 = vset.pattern.permute.xlu0 0
    %561 = vperm.xlu0 %560, %v555
    %v562 = vpop.permute.xlu0 %561
    %564 = vset.pattern.permute.xlu0 0
    %565 = vperm.xlu0 %564, %v559
    %v566 = vpop.permute.xlu0 %565
    %v568 = vmul.f32 %v562, %v527
    %v569 = vmul.f32 %v566, %v528
    %570 = vset.pattern.permute.xlu0 1
    %571 = vperm.xlu0 %570, %v555
    %v572 = vpop.permute.xlu0 %571
    %574 = vset.pattern.permute.xlu0 1
    %575 = vperm.xlu0 %574, %v559
    %v576 = vpop.permute.xlu0 %575
    %v578 = vmul.f32 %v572, %v527
    %v579 = vmul.f32 %v576, %v528
    %582 = vrot.lane.b32.xlu0 %v578, 96
    %v583 = vpop.permute.xlu0 %582
    %584 = vrot.lane.b32.xlu0 %v579, 96
    %v585 = vpop.permute.xlu0 %584
    %v588 = vadd.f32 %v568, %v583
    %v589 = vadd.f32 %v569, %v585
    %590 = vset.pattern.permute.xlu0 2
    %591 = vperm.xlu0 %590, %v555
    %v592 = vpop.permute.xlu0 %591
    %594 = vset.pattern.permute.xlu0 2
    %595 = vperm.xlu0 %594, %v559
    %v596 = vpop.permute.xlu0 %595
    %v598 = vmul.f32 %v592, %v527
    %v599 = vmul.f32 %v596, %v528
    %602 = vrot.lane.b32.xlu0 %v598, 64
    %v603 = vpop.permute.xlu0 %602
    %604 = vrot.lane.b32.xlu0 %v599, 64
    %v605 = vpop.permute.xlu0 %604
    %v608 = vadd.f32 %v588, %v603
    %v609 = vadd.f32 %v589, %v605
    %610 = vst.msk [vmem:[#allocation2] sm:$0xff] %vm151, %v608
    %611 = vst.msk [vmem:[#allocation2 + $0x8] sm:$0xff] %vm151, %v609
    // Predicated region
    $region46: #{tpu_custom_call.1} parent=1 // pred_check
      _
    $region47: #{tpu_custom_call.1} parent=1 // pred_check_branch
      %613 = sbr.rel (0) target = $region49
    $region48: #{tpu_custom_call.1} parent=1 // pred_region
      %s615 = ssub.s32 256, 256
      %616 = vsyncadd [#allocation3], %s615
      %s617 = sshll.u32 [#allocation2], 4
      %s618 = int_to_ptr.vmem [resolvable:$true] %s617
      %623 = dma.vmem_to_hbm [thread:$0]  %s618, 256, %s11, [#allocation3], 128, 128, 8
    $region49: #{tpu_custom_call.1} parent=1 // pred_fallthru
      _
    // Predicated region
    $region50: #{tpu_custom_call.1} parent=1 // pred_check
      _
    $region51: #{tpu_custom_call.1} parent=1 // pred_check_branch
      %625 = sbr.rel (0) target = $region53
    $region52: #{tpu_custom_call.1} parent=1 // pred_region
      %s627 = ssub.s32 32, 32
      %628 = vsyncadd [#allocation5], %s627
      %s630 = sshll.u32 [#allocation4], 4
      %s631 = int_to_ptr.vmem [resolvable:$true] %s630
      %633 = dma.vmem_to_hbm [thread:$0]  %s631, 32, %s12, [#allocation5]
    $region53: #{tpu_custom_call.1} parent=1 // pred_fallthru
      _
    // Predicated region
    $region54: #{tpu_custom_call.1} parent=1 // pred_check
      _
    $region55: #{tpu_custom_call.1} parent=1 // pred_check_branch
      %635 = sbr.rel (0) target = $region57
    $region56: #{tpu_custom_call.1} parent=1 // pred_region
      %636 = dma.done [#allocation3], 256
    $region57: #{tpu_custom_call.1} parent=1 // pred_fallthru
      _
    // Predicated region
    $region58: #{tpu_custom_call.1} parent=1 // pred_check
      _
    $region59: #{tpu_custom_call.1} parent=1 // pred_check_branch
      %638 = sbr.rel (0) target = $region61
    $region60: #{tpu_custom_call.1} parent=1 // pred_region
      %639 = dma.done [#allocation5], 32
    $region61: #{tpu_custom_call.1} parent=1 // pred_fallthru
      _
    %640 = vsyncpa [#allocation3], 1
    %641 = vsyncpa [#allocation5], 1

</llo_original>
